<compile_context>
chip_gen: v7x
topology: tpu7x:2x2x1
jax: 0.10.0
libtpu: 0.0.40
codegen_flags: <defaults>
</compile_context>

<pallas_src>
import jax
import jax.numpy as jnp
from jax.experimental import pallas as pl
from jax.experimental.pallas import tpu as pltpu

IN_FEATURES = 178
HIDDEN = 32
OUT_FEATURES = 5

HIDDEN_PAD = 128   # lane-dense intermediate (leave alone per review)
OUT_PAD = 8        # narrow f32 output block; [:, :5] sliced in wrapper

DEFAULT_BLOCK_B = 4096    # bigger tiles amortize the ~0.35us/step overhead
PALLAS_MIN_BATCH = 512    # below this, XLA's fused dot wins on fixed overhead


def _round_up(n, m):
    return ((n + m - 1) // m) * m


def mlp_kernel(x_ref, w1_ref, b1_ref, w2_ref, b2_ref, o_ref):
    # Layer 1: Linear(178 -> 32, hidden zero-padded to 128) + bias + ReLU.
    # (dropout1 / dropout2 are identity in eval mode.)
    h = jnp.dot(x_ref[...], w1_ref[...], preferred_element_type=jnp.float32)
    h = jnp.maximum(h + b1_ref[...], 0.0)
    # Layer 2: Linear(32 -> 5, zero-padded to 128 -> 8); f32 accumulation.
    y = jnp.dot(h.astype(w2_ref.dtype), w2_ref[...],
                preferred_element_type=jnp.float32)
    o_ref[...] = (y + b2_ref[...]).astype(o_ref.dtype)


def pad_params(w1, b1, w2, b2, stream_dtype=jnp.bfloat16):
    """Zero-pad / cast the weights ONCE (outside the per-forward path).
    Weights are stored (in, out), i.e. pre-transposed vs PyTorch's (out, in).
    Biases stay in float32 (added to an f32 accumulator; bytes are negligible).
    """
    w1_p = jnp.zeros((IN_FEATURES, HIDDEN_PAD), stream_dtype)
    w1_p = w1_p.at[:, :HIDDEN].set(w1.astype(stream_dtype))
    b1_p = jnp.zeros((1, HIDDEN_PAD), jnp.float32)
    b1_p = b1_p.at[:, :HIDDEN].set(b1.reshape(1, HIDDEN).astype(jnp.float32))
    w2_p = jnp.zeros((HIDDEN_PAD, OUT_PAD), stream_dtype)
    w2_p = w2_p.at[:HIDDEN, :OUT_FEATURES].set(w2.astype(stream_dtype))
    b2_p = jnp.zeros((1, OUT_PAD), jnp.float32)
    b2_p = b2_p.at[:, :OUT_FEATURES].set(
        b2.reshape(1, OUT_FEATURES).astype(jnp.float32))
    return w1_p, b1_p, w2_p, b2_p


def _mlp_pallas(x, w1_p, b1_p, w2_p, b2_p, *, block_b, stream_dtype):
    B = x.shape[0]
    itemsize = jnp.dtype(stream_dtype).itemsize
    # Sublane packing of the streamed dtype: bf16 packs 2 rows/sublane.
    sub = {4: 8, 2: 16, 1: 32}[itemsize]

    # Choose the number of grid steps: >= 2 and even whenever B is big enough,
    # so the "parallel" batch axis really shards over both v7x TensorCores.
    if B <= sub:
        num_steps = 1
        tb = sub
    else:
        num_steps = max(2, pl.cdiv(B, block_b))
        if num_steps % 2:
            num_steps += 1
        tb = _round_up(pl.cdiv(B, num_steps), sub)
    b_pad = num_steps * tb

    # Row-only padding of x (no 256-wide re-layout copy); cast to stream dtype.
    x_s = x.astype(stream_dtype)
    if b_pad != B:
        x_s = jnp.pad(x_s, ((0, b_pad - B), (0, 0)))

    weight_bytes = (w1_p.size * itemsize + w2_p.size * itemsize
                    + b1_p.size * 4 + b2_p.size * 4)
    cost = pl.CostEstimate(
        flops=2 * b_pad * IN_FEATURES * HIDDEN_PAD
              + 2 * b_pad * HIDDEN_PAD * OUT_PAD,
        transcendentals=0,
        bytes_accessed=b_pad * IN_FEATURES * itemsize   # streamed x
                       + b_pad * OUT_PAD * 4            # narrow f32 output
                       + weight_bytes,                  # resident weights
    )

    # VMEM: double-buffered x / out tiles + resident weights + f32 hidden tile.
    vmem_needed = (2 * tb * IN_FEATURES * itemsize
                   + 2 * tb * OUT_PAD * 4
                   + weight_bytes
                   + 2 * tb * HIDDEN_PAD * 4)
    vmem_limit = int(min(max(vmem_needed + (4 << 20), 8 << 20), 32 << 20))

    out = pl.pallas_call(
        mlp_kernel,
        out_shape=jax.ShapeDtypeStruct((b_pad, OUT_PAD), jnp.float32),
        grid=(num_steps,),
        in_specs=[
            # Streamed: full (unpadded) 178-wide rows, tb per step.
            pl.BlockSpec((tb, IN_FEATURES), lambda i: (i, 0)),
            # Resident weights / biases (constant index maps).
            pl.BlockSpec((IN_FEATURES, HIDDEN_PAD), lambda i: (0, 0)),
            pl.BlockSpec((1, HIDDEN_PAD), lambda i: (0, 0)),
            pl.BlockSpec((HIDDEN_PAD, OUT_PAD), lambda i: (0, 0)),
            pl.BlockSpec((1, OUT_PAD), lambda i: (0, 0)),
        ],
        out_specs=pl.BlockSpec((tb, OUT_PAD), lambda i: (i, 0)),
        compiler_params=pltpu.CompilerParams(
            dimension_semantics=("parallel",),  # batch sharded over TCs
            vmem_limit_bytes=vmem_limit,
        ),
        cost_estimate=cost,
    )(x_s, w1_p, b1_p, w2_p, b2_p)

    # Drop batch padding and the 3 zero output lanes.
    return out[:B, :OUT_FEATURES]


def make_mlp_forward(w1, b1, w2, b2, *, stream_dtype=jnp.bfloat16,
                     block_b=DEFAULT_BLOCK_B, use_pallas=None):
    """Returns a forward(x) closure.  Weights are padded/cast once here, not
    per call.  x: (B, 178); returns (B, 5) float32."""
    padded = pad_params(w1, b1, w2, b2, stream_dtype=stream_dtype)

    def forward(x):
        B = x.shape[0]
        go_pallas = use_pallas if use_pallas is not None else B >= PALLAS_MIN_BATCH
        if not go_pallas:
            # Tiny-batch fast path: pallas_call fixed overhead dominates here.
            h = jnp.maximum(x.astype(jnp.float32) @ w1 + b1, 0.0)
            return h @ w2 + b2
        return _mlp_pallas(x, *padded, block_b=block_b,
                           stream_dtype=stream_dtype)

    return forward


def init_params(key):
    """Deterministic init mimicking nn.Linear (U[-1/sqrt(fan_in), +1/sqrt(fan_in)])."""
    k1, k2, k3, k4 = jax.random.split(key, 4)
    bound1 = 1.0 / (IN_FEATURES ** 0.5)
    bound2 = 1.0 / (HIDDEN ** 0.5)
    w1 = jax.random.uniform(k1, (IN_FEATURES, HIDDEN), jnp.float32, -bound1, bound1)
    b1 = jax.random.uniform(k2, (1, HIDDEN), jnp.float32, -bound1, bound1)
    w2 = jax.random.uniform(k3, (HIDDEN, OUT_FEATURES), jnp.float32, -bound2, bound2)
    b2 = jax.random.uniform(k4, (1, OUT_FEATURES), jnp.float32, -bound2, bound2)
    return w1, b1, w2, b2


if __name__ == "__main__":
    key = jax.random.PRNGKey(0)
    kx, kx2, kp = jax.random.split(key, 3)

    B = 32  # small test batch
    x = jax.random.normal(kx, (B, IN_FEATURES), jnp.float32)
    w1, b1, w2, b2 = init_params(kp)

    # Pure-JAX reference (eval-mode dropout = identity).
    ref = jnp.maximum(x @ w1 + b1, 0.0) @ w2 + b2

    # Forced Pallas path, f32 streaming (tight tolerance).
    fwd_f32 = make_mlp_forward(w1, b1, w2, b2, stream_dtype=jnp.float32,
                               use_pallas=True)
    out_f32 = jax.block_until_ready(fwd_f32(x))
    assert out_f32.shape == (B, OUT_FEATURES)
    assert jnp.allclose(out_f32, ref, atol=1e-4, rtol=1e-4)

    # Forced Pallas path, bf16 streaming (the default; halves input bytes).
    fwd_bf16 = make_mlp_forward(w1, b1, w2, b2, use_pallas=True)
    out_bf16 = jax.block_until_ready(fwd_bf16(x))
    assert jnp.allclose(out_bf16, ref, atol=5e-2, rtol=5e-2)

    # Uneven batch exercises the row-only padding path.
    B2 = 50
    x2 = jax.random.normal(kx2, (B2, IN_FEATURES), jnp.float32)
    ref2 = jnp.maximum(x2 @ w1 + b1, 0.0) @ w2 + b2
    out2 = jax.block_until_ready(fwd_bf16(x2))
    assert out2.shape == (B2, OUT_FEATURES)
    assert jnp.allclose(out2, ref2, atol=5e-2, rtol=5e-2)

    # Auto-dispatch path (small B -> plain XLA fast path).
    fwd_auto = make_mlp_forward(w1, b1, w2, b2)
    out_auto = jax.block_until_ready(fwd_auto(x))
    assert jnp.allclose(out_auto, ref, atol=1e-5, rtol=1e-5)

    print("KERNEL_OK")
</pallas_src>

<mosaic_0001>
module attributes {stable_mosaic.version = 11 : i64} {
  func.func @mlp_kernel(%arg0: i32, %arg1: memref<16x178xf32, #tpu.memory_space<vmem>>, %arg2: memref<178x128xf32, #tpu.memory_space<vmem>>, %arg3: memref<1x128xf32, #tpu.memory_space<vmem>>, %arg4: memref<128x8xf32, #tpu.memory_space<vmem>>, %arg5: memref<1x8xf32, #tpu.memory_space<vmem>>, %arg6: memref<16x8xf32, #tpu.memory_space<vmem>>) attributes {dimension_semantics = [#tpu.dimension_semantics<parallel>], iteration_bounds = array<i64: 2>, scalar_prefetch = 0 : i64, scratch_operands = 0 : i64, tpu.core_type = #tpu.core_type<tc>, window_params = [{transform_indices = @transform_0, window_bounds = array<i64: 16, 178>}, {pipeline_mode = #tpu.pipeline_mode<synchronous>, transform_indices = @transform_1, window_bounds = array<i64: 178, 128>}, {pipeline_mode = #tpu.pipeline_mode<synchronous>, transform_indices = @transform_2, window_bounds = array<i64: 1, 128>}, {pipeline_mode = #tpu.pipeline_mode<synchronous>, transform_indices = @transform_3, window_bounds = array<i64: 128, 8>}, {pipeline_mode = #tpu.pipeline_mode<synchronous>, transform_indices = @transform_4, window_bounds = array<i64: 1, 8>}, {transform_indices = @transform_5, window_bounds = array<i64: 16, 8>}]} {
    %c0 = arith.constant 0 : index
    %c0_0 = arith.constant 0 : index
    %0 = vector.load %arg1[%c0, %c0_0] : memref<16x178xf32, #tpu.memory_space<vmem>>, vector<16x178xf32>
    %c0_1 = arith.constant 0 : index
    %c0_2 = arith.constant 0 : index
    %1 = vector.load %arg2[%c0_1, %c0_2] : memref<178x128xf32, #tpu.memory_space<vmem>>, vector<178x128xf32>
    %cst = arith.constant dense<0.000000e+00> : vector<16x128xf32>
    %2 = tpu.matmul %0, %1, %cst {dimension_numbers = #tpu.dot_dimension_numbers<[1], [0], [0], [1], [0, 0, 1, 1], [], []>} : vector<16x178xf32>, vector<178x128xf32>, vector<16x128xf32> -> vector<16x128xf32>
    %c0_3 = arith.constant 0 : index
    %c0_4 = arith.constant 0 : index
    %3 = vector.load %arg3[%c0_3, %c0_4] : memref<1x128xf32, #tpu.memory_space<vmem>>, vector<1x128xf32>
    %4 = vector.broadcast %3 : vector<1x128xf32> to vector<16x128xf32>
    %5 = arith.addf %2, %4 : vector<16x128xf32>
    %cst_5 = arith.constant 0.000000e+00 : f32
    %6 = vector.broadcast %cst_5 : f32 to vector<16x128xf32>
    %7 = arith.maximumf %5, %6 : vector<16x128xf32>
    %c0_6 = arith.constant 0 : index
    %c0_7 = arith.constant 0 : index
    %8 = vector.load %arg4[%c0_6, %c0_7] : memref<128x8xf32, #tpu.memory_space<vmem>>, vector<128x8xf32>
    %cst_8 = arith.constant dense<0.000000e+00> : vector<16x8xf32>
    %9 = tpu.matmul %7, %8, %cst_8 {dimension_numbers = #tpu.dot_dimension_numbers<[1], [0], [0], [1], [0, 0, 1, 1], [], []>} : vector<16x128xf32>, vector<128x8xf32>, vector<16x8xf32> -> vector<16x8xf32>
    %c0_9 = arith.constant 0 : index
    %c0_10 = arith.constant 0 : index
    %10 = vector.load %arg5[%c0_9, %c0_10] : memref<1x8xf32, #tpu.memory_space<vmem>>, vector<1x8xf32>
    %11 = vector.broadcast %10 : vector<1x8xf32> to vector<16x8xf32>
    %12 = arith.addf %9, %11 : vector<16x8xf32>
    %c0_11 = arith.constant 0 : index
    %c0_12 = arith.constant 0 : index
    %13 = vector.load %arg6[%c0_11, %c0_12] : memref<16x8xf32, #tpu.memory_space<vmem>>, vector<16x8xf32>
    tpu.vector_store %arg6[%c0_11, %c0_12], %12 {strides = array<i32>} : memref<16x8xf32, #tpu.memory_space<vmem>>, vector<16x8xf32>,
    return
  }
  func.func @transform_0(%arg0: i32) -> (i32, i32) {
    %c0_i32 = arith.constant 0 : i32
    %c0_i32_0 = arith.constant 0 : i32
    return %arg0, %c0_i32 : i32, i32
  }
  func.func @transform_1(%arg0: i32) -> (i32, i32) {
    %c0_i32 = arith.constant 0 : i32
    %c0_i32_0 = arith.constant 0 : i32
    %c0_i32_1 = arith.constant 0 : i32
    return %c0_i32, %c0_i32_0 : i32, i32
  }
  func.func @transform_2(%arg0: i32) -> (i32, i32) {
    %c0_i32 = arith.constant 0 : i32
    %c0_i32_0 = arith.constant 0 : i32
    %c0_i32_1 = arith.constant 0 : i32
    return %c0_i32, %c0_i32_0 : i32, i32
  }
  func.func @transform_3(%arg0: i32) -> (i32, i32) {
    %c0_i32 = arith.constant 0 : i32
    %c0_i32_0 = arith.constant 0 : i32
    %c0_i32_1 = arith.constant 0 : i32
    return %c0_i32, %c0_i32_0 : i32, i32
  }
  func.func @transform_4(%arg0: i32) -> (i32, i32) {
    %c0_i32 = arith.constant 0 : i32
    %c0_i32_0 = arith.constant 0 : i32
    %c0_i32_1 = arith.constant 0 : i32
    return %c0_i32, %c0_i32_0 : i32, i32
  }
  func.func @transform_5(%arg0: i32) -> (i32, i32) {
    %c0_i32 = arith.constant 0 : i32
    %c0_i32_0 = arith.constant 0 : i32
    return %arg0, %c0_i32 : i32, i32
  }
}

</mosaic_0001>

<llo_original>
// kernel: tpu_custom_call.1
$region0: #{tpu_custom_call.1}
  #allocation0 [shape = 'u32[]', space=smem, size = 0x4, offset = 0x4, fixed_abs, tag = 'smem constant byte address 0x4 - core index']
  #allocation1 [shape = 'u32[144,128]{1,0:T(1,128)}', space=vmem, size = 0x12000, scoped, tag = 'internal scratch']
  %s0 = inlined_call_operand.vmem [shape: f32[32,178], index: 0, kind: input, shape index: {}]
  %s1 = inlined_call_operand.hbm [shape: f32[178,128], index: 1, kind: input, shape index: {}]
  %s2 = inlined_call_operand.vmem [shape: f32[1,128], index: 2, kind: input, shape index: {}]
  %s3 = inlined_call_operand.vmem [shape: f32[128,8], index: 3, kind: input, shape index: {}]
  %s4 = inlined_call_operand.vmem [shape: f32[1,8], index: 4, kind: input, shape index: {}]
  %s5 = inlined_call_operand.vmem [shape: f32[32,8], index: 5, kind: output, shape index: {}]
  %s6 = sld [smem:[#allocation0]]
  $region57: #{tpu_custom_call.1} parent=0
    _
  %s8 = ssub.s32 1, %s6
  %s9 = scalar_select 0, %s8, %s6
  $region1: #{tpu_custom_call.1} parent=0
    #allocation2 [shape = 'u8[94208]{0}', space=vmem, size = 0x17000, scoped, tag = 'input window, operand 1, single buffered']
    #allocation3 [shape = 's32[2]{0}', space=sflag, size = 0x8, scoped, tag = 'scoped memory for tpu_custom_call.1']
    %10 = vsyncpa [#allocation3], 0
    loop: start=0, step=1, limit=4
    $region2: #{tpu_custom_call.1} parent=1 // loop_pre_header
      _
    $region3: #{tpu_custom_call.1} parent=1 // loop_header
      %s12 = sphi 0, %s16
      %p13 = scmp.ge.s32.totalorder %s12, 4
      %s22 = sphi 0, %s24
      %s25 = sphi 0, %s22
      %s26 = sphi 0, %s25
      %s42 = sphi 0, %s26
      %s46 = sphi 0, %s46
      %s48 = sphi 0, %s46
      %s49 = sphi 0, %s48
      %s63 = sphi 0, %s49
      %s67 = sphi 0, %s67
      %s69 = sphi 0, %s67
      %s70 = sphi 0, %s69
      %s84 = sphi 0, %s70
      %s88 = sphi 0, %s88
      %s90 = sphi 0, %s88
      %s91 = sphi 0, %s90
      %s105 = sphi 0, %s91
      %s109 = sphi 0, %s109
      %s111 = sphi 0, %s109
      %s112 = sphi 0, %s111
      %s126 = sphi 0, %s112
      %s132 = sphi 0, %s134
      %s135 = sphi 0, %s132
      %s136 = sphi 0, %s135
      %s152 = sphi 0, %s136
    $region4: #{tpu_custom_call.1} parent=1 // loop_header_branch
      %15 = sbr.rel (%p13) target = $region8
    $region5: #{tpu_custom_call.1} parent=1 // loop_body
      %s17 = ssub.s32 %s12, 1
      %s18 = ssub.s32 %s12, 2
      %s19 = sadd.s32 %s12, 1
      %s20 = ssub.s32 %s12, %s19
      %p21 = scmp.eq.s32.totalorder %s20, 0
      %s23 = sadd.s32 %s22, 1
      %s24 = scalar_select %p21, %s22, %s23
      %p27 = pneg %p21
      %p28 = scmp.eq.s32.totalorder %s12, 1
      %p29 = por %p27, %p28
      %p30 = scmp.ne.s32.totalorder %s22, %s25
      %p31 = scmp.eq.s32.totalorder %s12, 0
      %p32 = por %p30, %p31
      %p33 = scmp.ne.s32.totalorder %s22, %s25
      %p34 = scmp.eq.s32.totalorder %s17, 1
      %p35 = por %p33, %p34
      %p36 = scmp.ne.s32.totalorder %s25, %s26
      %p37 = scmp.eq.s32.totalorder %s17, 0
      %p38 = por %p36, %p37
      %p39 = scmp.ne.s32.totalorder %s25, %s26
      %p40 = scmp.eq.s32.totalorder %s18, 1
      %p41 = por %p39, %p40
      %p43 = scmp.ne.s32.totalorder %s26, %s42
      %p44 = scmp.eq.s32.totalorder %s18, 0
      %p45 = por %p43, %p44
      %s47 = sadd.s32 %s46, 1
      %p50 = scmp.eq.s32.totalorder %s12, 1
      %p51 = scmp.ne.s32.totalorder %s46, %s48
      %p52 = scmp.eq.s32.totalorder %s12, 0
      %p53 = por %p51, %p52
      %p54 = scmp.ne.s32.totalorder %s46, %s48
      %p55 = scmp.eq.s32.totalorder %s17, 1
      %p56 = por %p54, %p55
      %p57 = scmp.ne.s32.totalorder %s48, %s49
      %p58 = scmp.eq.s32.totalorder %s17, 0
      %p59 = por %p57, %p58
      %p60 = scmp.ne.s32.totalorder %s48, %s49
      %p61 = scmp.eq.s32.totalorder %s18, 1
      %p62 = por %p60, %p61
      %p64 = scmp.ne.s32.totalorder %s49, %s63
      %p65 = scmp.eq.s32.totalorder %s18, 0
      %p66 = por %p64, %p65
      %s68 = sadd.s32 %s67, 1
      %p71 = scmp.eq.s32.totalorder %s12, 1
      %p72 = scmp.ne.s32.totalorder %s67, %s69
      %p73 = scmp.eq.s32.totalorder %s12, 0
      %p74 = por %p72, %p73
      %p75 = scmp.ne.s32.totalorder %s67, %s69
      %p76 = scmp.eq.s32.totalorder %s17, 1
      %p77 = por %p75, %p76
      %p78 = scmp.ne.s32.totalorder %s69, %s70
      %p79 = scmp.eq.s32.totalorder %s17, 0
      %p80 = por %p78, %p79
      %p81 = scmp.ne.s32.totalorder %s69, %s70
      %p82 = scmp.eq.s32.totalorder %s18, 1
      %p83 = por %p81, %p82
      %p85 = scmp.ne.s32.totalorder %s70, %s84
      %p86 = scmp.eq.s32.totalorder %s18, 0
      %p87 = por %p85, %p86
      %s89 = sadd.s32 %s88, 1
      %p92 = scmp.eq.s32.totalorder %s12, 1
      %p93 = scmp.ne.s32.totalorder %s88, %s90
      %p94 = scmp.eq.s32.totalorder %s12, 0
      %p95 = por %p93, %p94
      %p96 = scmp.ne.s32.totalorder %s88, %s90
      %p97 = scmp.eq.s32.totalorder %s17, 1
      %p98 = por %p96, %p97
      %p99 = scmp.ne.s32.totalorder %s90, %s91
      %p100 = scmp.eq.s32.totalorder %s17, 0
      %p101 = por %p99, %p100
      %p102 = scmp.ne.s32.totalorder %s90, %s91
      %p103 = scmp.eq.s32.totalorder %s18, 1
      %p104 = por %p102, %p103
      %p106 = scmp.ne.s32.totalorder %s91, %s105
      %p107 = scmp.eq.s32.totalorder %s18, 0
      %p108 = por %p106, %p107
      %s110 = sadd.s32 %s109, 1
      %p113 = scmp.eq.s32.totalorder %s12, 1
      %p114 = scmp.ne.s32.totalorder %s109, %s111
      %p115 = scmp.eq.s32.totalorder %s12, 0
      %p116 = por %p114, %p115
      %p117 = scmp.ne.s32.totalorder %s109, %s111
      %p118 = scmp.eq.s32.totalorder %s17, 1
      %p119 = por %p117, %p118
      %p120 = scmp.ne.s32.totalorder %s111, %s112
      %p121 = scmp.eq.s32.totalorder %s17, 0
      %p122 = por %p120, %p121
      %p123 = scmp.ne.s32.totalorder %s111, %s112
      %p124 = scmp.eq.s32.totalorder %s18, 1
      %p125 = por %p123, %p124
      %p127 = scmp.ne.s32.totalorder %s112, %s126
      %p128 = scmp.eq.s32.totalorder %s18, 0
      %p129 = por %p127, %p128
      %s130 = ssub.s32 %s12, %s19
      %p131 = scmp.eq.s32.totalorder %s130, 0
      %s133 = sadd.s32 %s132, 1
      %s134 = scalar_select %p131, %s132, %s133
      %p137 = pneg %p131
      %p138 = scmp.eq.s32.totalorder %s12, 1
      %p139 = por %p137, %p138
      %p140 = scmp.ne.s32.totalorder %s132, %s135
      %p141 = scmp.eq.s32.totalorder %s12, 0
      %p142 = por %p140, %p141
      %p143 = scmp.ne.s32.totalorder %s132, %s135
      %p144 = scmp.eq.s32.totalorder %s17, 1
      %p145 = por %p143, %p144
      %p146 = scmp.ne.s32.totalorder %s135, %s136
      %p147 = scmp.eq.s32.totalorder %s17, 0
      %p148 = por %p146, %p147
      %p149 = scmp.ne.s32.totalorder %s135, %s136
      %p150 = scmp.eq.s32.totalorder %s18, 1
      %p151 = por %p149, %p150
      %p153 = scmp.ne.s32.totalorder %s136, %s152
      %p154 = scmp.eq.s32.totalorder %s18, 0
      %p155 = por %p153, %p154
      %p156 = scmp.le.s32.totalorder 1, %s12
      %p157 = scmp.lt.s32.totalorder %s12, 3
      %p158 = pnand %p156, %p157
      %p159 = pneg %p158
      // Predicated region
      $region9: #{tpu_custom_call.1} parent=5 // pred_check
        _
      $region10: #{tpu_custom_call.1} parent=5 // pred_check_branch
        %161 = sbr.rel (%p158) target = $region12
      $region11: #{tpu_custom_call.1} parent=5 // pred_region
        %s162 = ssub.s32 %s12, 1
        // Predicated region
        $region13: #{tpu_custom_call.1} parent=11 // pred_check
          %p163 = pneg %p59
        $region14: #{tpu_custom_call.1} parent=11 // pred_check_branch
          %165 = sbr.rel (%p163) target = $region16
        $region15: #{tpu_custom_call.1} parent=11 // pred_region
          %s167 = ssub.s32 2944, 2944
          %168 = vsyncadd [#allocation3], %s167
          %s169 = sshll.u32 [#allocation2], 4
          %s170 = int_to_ptr.vmem [resolvable:$true] %s169
          %175 = dma.hbm_to_vmem [thread:$0]  %s1, 2944, %s170, [#allocation3], 128, 128, 8
        $region16: #{tpu_custom_call.1} parent=11 // pred_fallthru
          _
        // Predicated region
        $region17: #{tpu_custom_call.1} parent=11 // pred_check
          %p176 = pneg %p80
        $region18: #{tpu_custom_call.1} parent=11 // pred_check_branch
          %178 = sbr.rel (%p176) target = $region20
        $region19: #{tpu_custom_call.1} parent=11 // pred_region
          _
        $region20: #{tpu_custom_call.1} parent=11 // pred_fallthru
          _
        // Predicated region
        $region21: #{tpu_custom_call.1} parent=11 // pred_check
          %p179 = pneg %p101
        $region22: #{tpu_custom_call.1} parent=11 // pred_check_branch
          %181 = sbr.rel (%p179) target = $region24
        $region23: #{tpu_custom_call.1} parent=11 // pred_region
          _
        $region24: #{tpu_custom_call.1} parent=11 // pred_fallthru
          _
        // Predicated region
        $region25: #{tpu_custom_call.1} parent=11 // pred_check
          %p182 = pneg %p122
        $region26: #{tpu_custom_call.1} parent=11 // pred_check_branch
          %184 = sbr.rel (%p182) target = $region28
        $region27: #{tpu_custom_call.1} parent=11 // pred_region
          _
        $region28: #{tpu_custom_call.1} parent=11 // pred_fallthru
          _
      $region12: #{tpu_custom_call.1} parent=5 // pred_fallthru
        _
      %p185 = scmp.lt.s32.totalorder %s12, 2
      // Predicated region
      $region29: #{tpu_custom_call.1} parent=5 // pred_check
        %p186 = pneg %p185
      $region30: #{tpu_custom_call.1} parent=5 // pred_check_branch
        %188 = sbr.rel (%p186) target = $region32
      $region31: #{tpu_custom_call.1} parent=5 // pred_region
        // Predicated region
        $region33: #{tpu_custom_call.1} parent=31 // pred_check
          %p189 = pneg %p32
        $region34: #{tpu_custom_call.1} parent=31 // pred_check_branch
          %191 = sbr.rel (%p189) target = $region36
        $region35: #{tpu_custom_call.1} parent=31 // pred_region
          %s192 = smul.u32 2, %s12
          %p193 = scmp.lt.s32.totalorder %s192, 3
          %s194 = scalar_select %p193, %s192, 3
          %s195 = smul.addr %s194, 2
          %s196 = smul.addr %s195, 8
          %s197 = scalar_lea.vmem %s0, %s196
          %s198 = smul.u32 2, %s12
        $region36: #{tpu_custom_call.1} parent=31 // pred_fallthru
          _
      $region32: #{tpu_custom_call.1} parent=5 // pred_fallthru
        _
      %p199 = scmp.le.s32.totalorder 1, %s12
      %p200 = scmp.lt.s32.totalorder %s12, 3
      %p201 = pnand %p199, %p200
      %p202 = pneg %p201
      // Predicated region
      $region37: #{tpu_custom_call.1} parent=5 // pred_check
        _
      $region38: #{tpu_custom_call.1} parent=5 // pred_check_branch
        %204 = sbr.rel (%p201) target = $region40
      $region39: #{tpu_custom_call.1} parent=5 // pred_region
        %s205 = ssub.s32 %s12, 1
        // Predicated region
        $region41: #{tpu_custom_call.1} parent=39 // pred_check
          %p206 = pneg %p59
        $region42: #{tpu_custom_call.1} parent=39 // pred_check_branch
          %208 = sbr.rel (%p206) target = $region44
        $region43: #{tpu_custom_call.1} parent=39 // pred_region
          %209 = dma.done [#allocation3], 2944
        $region44: #{tpu_custom_call.1} parent=39 // pred_fallthru
          _
        %s210 = smul.u32 2, %s17
        %p211 = scmp.lt.s32.totalorder %s210, 3
        %s212 = scalar_select %p211, %s210, 3
        %s213 = smul.addr %s212, 2
        %s214 = smul.addr %s213, 8
        %s215 = scalar_lea.vmem %s0, %s214
        %p216 = pneg %p38
        %p217 = pneg %p35
        %p218 = pneg %p59
        %p219 = pneg %p56
        %p220 = pneg %p80
        %p221 = pneg %p77
        %p222 = pneg %p101
        %p223 = pneg %p98
        %p224 = pneg %p122
        %p225 = pneg %p119
        %p226 = pneg %p148
        %p227 = pneg %p145
        %s228 = smul.u32 2, %s17
        %p229 = scmp.lt.s32.totalorder %s228, 3
        %s230 = scalar_select %p229, %s228, 3
        %s231 = smul.addr %s230, 8
        %s232 = scalar_lea.vmem %s5, %s231
        %s233 = smul.u32 2, %s17
        %p234 = scmp.lt.s32.totalorder %s233, 3
        %s235 = scalar_select %p234, %s233, 3
        %s236 = smul.addr %s235, 2
        %s237 = smul.addr %s236, 8
        %s238 = scalar_lea.vmem %s0, %s237
        %s239 = smul.u32 2, %s17
        %s240 = smul.u32 2, %s17
        %p241 = scmp.lt.s32.totalorder %s240, 3
        %s242 = scalar_select %p241, %s240, 3
        %s243 = smul.addr %s242, 8
        %s244 = scalar_lea.vmem %s5, %s243
        %s245 = smul.u32 2, %s17
        %v246 = vld [vmem:[%s238] sm:$0xff]
        %v247 = vld [vmem:[%s238 + $0x8] sm:$0xff]
        %v248 = vld [vmem:[%s238 + $0x10] sm:$0xff]
        %v249 = vld [vmem:[%s238 + $0x18] sm:$0xff]
        %v250 = vld [vmem:[#allocation2] sm:$0xff]
        %v251 = vld [vmem:[#allocation2 + $0x8] sm:$0xff]
        %v252 = vld [vmem:[#allocation2 + $0x10] sm:$0xff]
        %v253 = vld [vmem:[#allocation2 + $0x18] sm:$0xff]
        %v254 = vld [vmem:[#allocation2 + $0x20] sm:$0xff]
        %v255 = vld [vmem:[#allocation2 + $0x28] sm:$0xff]
        %v256 = vld [vmem:[#allocation2 + $0x30] sm:$0xff]
        %v257 = vld [vmem:[#allocation2 + $0x38] sm:$0xff]
        %v258 = vld [vmem:[#allocation2 + $0x40] sm:$0xff]
        %v259 = vld [vmem:[#allocation2 + $0x48] sm:$0xff]
        %v260 = vld [vmem:[#allocation2 + $0x50] sm:$0xff]
        %v261 = vld [vmem:[#allocation2 + $0x58] sm:$0xff]
        %v262 = vld [vmem:[#allocation2 + $0x60] sm:$0xff]
        %v263 = vld [vmem:[#allocation2 + $0x68] sm:$0xff]
        %v264 = vld [vmem:[#allocation2 + $0x70] sm:$0xff]
        %v265 = vld [vmem:[#allocation2 + $0x78] sm:$0xff]
        %v266 = vld [vmem:[#allocation2 + $0x80] sm:$0xff]
        %v267 = vld [vmem:[#allocation2 + $0x88] sm:$0xff]
        %v268 = vld [vmem:[#allocation2 + $0x90] sm:$0xff]
        %v269 = vld [vmem:[#allocation2 + $0x98] sm:$0xff]
        %v270 = vld [vmem:[#allocation2 + $0xa0] sm:$0xff]
        %v271 = vld [vmem:[#allocation2 + $0xa8] sm:$0xff]
        %v272 = vld [vmem:[#allocation2 + $0xb0] sm:$0x3]
        %v273 = vld [vmem:[%s2] sm:$0x1]
        %v275 = vlaneseq
        %v276 = vshrl.u32 %v275, 7
        %v277 = vsub.s32 0, %v276
        %v278 = vrot.slane %v273, %v277
        %vm280 = vcmask 408576
        %v282 = vsel %vm280, %v247, 0
        %v285 = vsel %vm280, %v249, 0
        %vm287 = vcmask 1041408
        %v289 = vsel %vm287, %v272, 0
        %291 = vmatprep.subr.mxu0 0.0
        %292 = vmatpush1.msra.mxu0 %v250
        %293 = vmatprep.subr.mxu0 0.0
        %294 = vmatpush1.msra.mxu0 %v251
        %295 = vmatprep.subr.mxu0 0.0
        %296 = vmatpush1.msra.mxu0 %v252
        %297 = vmatprep.subr.mxu0 0.0
        %298 = vmatpush1.msra.mxu0 %v253
        %299 = vmatprep.subr.mxu0 0.0
        %300 = vmatpush1.msra.mxu0 %v254
        %301 = vmatprep.subr.mxu0 0.0
        %302 = vmatpush1.msra.mxu0 %v255
        %303 = vmatprep.subr.mxu0 0.0
        %304 = vmatpush1.msra.mxu0 %v256
        %305 = vmatprep.subr.mxu0 0.0
        %306 = vmatpush1.msra.mxu0 %v257
        %307 = vmatprep.subr.mxu0 0.0
        %308 = vmatpush1.msra.mxu0 %v258
        %309 = vmatprep.subr.mxu0 0.0
        %310 = vmatpush1.msra.mxu0 %v259
        %311 = vmatprep.subr.mxu0 0.0
        %312 = vmatpush1.msra.mxu0 %v260
        %313 = vmatprep.subr.mxu0 0.0
        %314 = vmatpush1.msra.mxu0 %v261
        %315 = vmatprep.subr.mxu0 0.0
        %316 = vmatpush1.msra.mxu0 %v262
        %317 = vmatprep.subr.mxu0 0.0
        %318 = vmatpush1.msra.mxu0 %v263
        %319 = vmatprep.subr.mxu0 0.0
        %320 = vmatpush1.msra.mxu0 %v264
        %321 = vmatprep.subr.mxu0 0.0
        %322 = vmatpush1.msra.mxu0 %v265
        %323 = vmatprep.subr.mxu0 0.0
        %324 = vmatpush1.msra.mxu0 %v266
        %325 = vmatprep.subr.mxu0 0.0
        %326 = vmatpush1.msra.mxu0 %v267
        %327 = vmatprep.subr.mxu0 0.0
        %328 = vmatpush1.msra.mxu0 %v268
        %329 = vmatprep.subr.mxu0 0.0
        %330 = vmatpush1.msra.mxu0 %v269
        %331 = vmatprep.subr.mxu0 0.0
        %332 = vmatpush1.msra.mxu0 %v270
        %333 = vmatprep.subr.mxu0 0.0
        %334 = vmatpush1.msra.mxu0 %v271
        %335 = vmatprep.subr.mxu0 0.0
        %336 = vmatpush1.msra.mxu0 %v289
        %337 = vmatprep.subr.mxu0 0.0
        %338 = vmatpush1.msra.mxu0 0.0
        %339 = vmatprep.subr.mxu0 0.0
        %340 = vmatpush1.msra.mxu0 0.0
        %341 = vmatprep.subr.mxu0 0.0
        %342 = vmatpush1.msra.mxu0 0.0
        %343 = vmatprep.subr.mxu0 0.0
        %344 = vmatpush1.msra.mxu0 0.0
        %345 = vmatprep.subr.mxu0 0.0
        %346 = vmatpush1.msra.mxu0 0.0
        %347 = vmatprep.subr.mxu0 0.0
        %348 = vmatpush1.msra.mxu0 0.0
        %349 = vmatprep.subr.mxu0 0.0
        %350 = vmatpush1.msra.mxu0 0.0
        %351 = vmatprep.subr.mxu0 0.0
        %352 = vmatpush1.msra.mxu0 0.0
        %353 = vmatprep.subr.mxu0 0.0
        %354 = vmatpush1.msra.mxu0 0.0
        %355 = vmatprep.mubr.f32.mxu0 %v282
        %356 = vmatmul.mubr.f32.gmra.mrb[0].mxu0 %v246
        %v357 = vpop.f32.mrb[0].mxu0
        %v358 = vadd.f32 %v278, %v357
        %v359 = vpop.f32.mrb[0].mxu0
        %360 = vmatprep.mubr.f32.mxu0 %v285
        %361 = vmatmul.mubr.f32.gmra.mrb[0].mxu0 %v248
        %v362 = vpop.f32.mrb[0].mxu0
        %v363 = vadd.f32 %v278, %v362
        %v364 = vpop.f32.mrb[0].mxu0
        %365 = vdwg.mxu0
        %v366 = vmax.f32 %v358, 0.0
        %v367 = vmax.f32 %v363, 0.0
        %v368 = vld [vmem:[%s3] sm:$0xff]
        %v369 = vld [vmem:[%s3 + $0x8] sm:$0xff]
        %v370 = vld [vmem:[%s3 + $0x10] sm:$0xff]
        %v371 = vld [vmem:[%s3 + $0x18] sm:$0xff]
        %v372 = vld [vmem:[%s3 + $0x20] sm:$0xff]
        %v373 = vld [vmem:[%s3 + $0x28] sm:$0xff]
        %v374 = vld [vmem:[%s3 + $0x30] sm:$0xff]
        %v375 = vld [vmem:[%s3 + $0x38] sm:$0xff]
        %v376 = vld [vmem:[%s3 + $0x40] sm:$0xff]
        %v377 = vld [vmem:[%s3 + $0x48] sm:$0xff]
        %v378 = vld [vmem:[%s3 + $0x50] sm:$0xff]
        %v379 = vld [vmem:[%s3 + $0x58] sm:$0xff]
        %v380 = vld [vmem:[%s3 + $0x60] sm:$0xff]
        %v381 = vld [vmem:[%s3 + $0x68] sm:$0xff]
        %v382 = vld [vmem:[%s3 + $0x70] sm:$0xff]
        %v383 = vld [vmem:[%s3 + $0x78] sm:$0xff]
        %v384 = vld [vmem:[%s4] sm:$0x1]
        %v386 = vlaneseq
        %v387 = vshrl.u32 %v386, 7
        %v388 = vsub.s32 0, %v387
        %v389 = vrot.slane %v384, %v388
        %391 = vmatprep.subr.mxu0 0.0
        %392 = vmatpush1.msra.mxu0 %v368
        %393 = vmatprep.subr.mxu0 0.0
        %394 = vmatpush1.msra.mxu0 %v369
        %395 = vmatprep.subr.mxu0 0.0
        %396 = vmatpush1.msra.mxu0 %v370
        %397 = vmatprep.subr.mxu0 0.0
        %398 = vmatpush1.msra.mxu0 %v371
        %399 = vmatprep.subr.mxu0 0.0
        %400 = vmatpush1.msra.mxu0 %v372
        %401 = vmatprep.subr.mxu0 0.0
        %402 = vmatpush1.msra.mxu0 %v373
        %403 = vmatprep.subr.mxu0 0.0
        %404 = vmatpush1.msra.mxu0 %v374
        %405 = vmatprep.subr.mxu0 0.0
        %406 = vmatpush1.msra.mxu0 %v375
        %407 = vmatprep.subr.mxu0 0.0
        %408 = vmatpush1.msra.mxu0 %v376
        %409 = vmatprep.subr.mxu0 0.0
        %410 = vmatpush1.msra.mxu0 %v377
        %411 = vmatprep.subr.mxu0 0.0
        %412 = vmatpush1.msra.mxu0 %v378
        %413 = vmatprep.subr.mxu0 0.0
        %414 = vmatpush1.msra.mxu0 %v379
        %415 = vmatprep.subr.mxu0 0.0
        %416 = vmatpush1.msra.mxu0 %v380
        %417 = vmatprep.subr.mxu0 0.0
        %418 = vmatpush1.msra.mxu0 %v381
        %419 = vmatprep.subr.mxu0 0.0
        %420 = vmatpush1.msra.mxu0 %v382
        %421 = vmatprep.subr.mxu0 0.0
        %422 = vmatpush1.msra.mxu0 %v383
        %423 = vmatprep.subr.mxu0 0.0
        %424 = vmatpush1.msra.mxu0 0.0
        %425 = vmatprep.subr.mxu0 0.0
        %426 = vmatpush1.msra.mxu0 0.0
        %427 = vmatprep.subr.mxu0 0.0
        %428 = vmatpush1.msra.mxu0 0.0
        %429 = vmatprep.subr.mxu0 0.0
        %430 = vmatpush1.msra.mxu0 0.0
        %431 = vmatprep.subr.mxu0 0.0
        %432 = vmatpush1.msra.mxu0 0.0
        %433 = vmatprep.subr.mxu0 0.0
        %434 = vmatpush1.msra.mxu0 0.0
        %435 = vmatprep.subr.mxu0 0.0
        %436 = vmatpush1.msra.mxu0 0.0
        %437 = vmatprep.subr.mxu0 0.0
        %438 = vmatpush1.msra.mxu0 0.0
        %439 = vmatprep.subr.mxu0 0.0
        %440 = vmatpush1.msra.mxu0 0.0
        %441 = vmatprep.subr.mxu0 0.0
        %442 = vmatpush1.msra.mxu0 0.0
        %443 = vmatprep.subr.mxu0 0.0
        %444 = vmatpush1.msra.mxu0 0.0
        %445 = vmatprep.subr.mxu0 0.0
        %446 = vmatpush1.msra.mxu0 0.0
        %447 = vmatprep.subr.mxu0 0.0
        %448 = vmatpush1.msra.mxu0 0.0
        %449 = vmatprep.subr.mxu0 0.0
        %450 = vmatpush1.msra.mxu0 0.0
        %451 = vmatprep.subr.mxu0 0.0
        %452 = vmatpush1.msra.mxu0 0.0
        %453 = vmatprep.subr.mxu0 0.0
        %454 = vmatpush1.msra.mxu0 0.0
        %455 = vmatprep.mubr.f32.mxu0 0.0
        %456 = vmatmul.mubr.f32.gmra.mrb[0].mxu0 %v366
        %v457 = vpop.f32.mrb[0].mxu0
        %v458 = vadd.f32 %v389, %v457
        %v459 = vpop.f32.mrb[0].mxu0
        %460 = vmatprep.mubr.f32.mxu0 0.0
        %461 = vmatmul.mubr.f32.gmra.mrb[0].mxu0 %v367
        %v462 = vpop.f32.mrb[0].mxu0
        %v463 = vadd.f32 %v389, %v462
        %v464 = vpop.f32.mrb[0].mxu0
        %465 = vdwg.mxu0
        %vm466 = vcmask 64512
        %467 = vst.msk [vmem:[%s244] sm:$0xff] %vm466, %v458
        %468 = vst.msk [vmem:[%s244 + $0x8] sm:$0xff] %vm466, %v463
        %s469 = smul.u32 2, %s17
        %p470 = scmp.lt.s32.totalorder %s469, 3
        %s471 = scalar_select %p470, %s469, 3
        %s472 = smul.addr %s471, 8
        %s473 = scalar_lea.vmem %s5, %s472
        // Predicated region
        $region45: #{tpu_custom_call.1} parent=39 // pred_check
          %p474 = pneg %p145
        $region46: #{tpu_custom_call.1} parent=39 // pred_check_branch
          %476 = sbr.rel (%p474) target = $region48
        $region47: #{tpu_custom_call.1} parent=39 // pred_region
          %s477 = smul.u32 2, %s17
        $region48: #{tpu_custom_call.1} parent=39 // pred_fallthru
          _
      $region40: #{tpu_custom_call.1} parent=5 // pred_fallthru
        _
      %p478 = scmp.le.s32.totalorder 2, %s12
      // Predicated region
      $region49: #{tpu_custom_call.1} parent=5 // pred_check
        %p479 = pneg %p478
      $region50: #{tpu_custom_call.1} parent=5 // pred_check_branch
        %481 = sbr.rel (%p479) target = $region52
      $region51: #{tpu_custom_call.1} parent=5 // pred_region
        %s482 = ssub.s32 %s12, 2
        // Predicated region
        $region53: #{tpu_custom_call.1} parent=51 // pred_check
          %p483 = pneg %p151
        $region54: #{tpu_custom_call.1} parent=51 // pred_check_branch
          %485 = sbr.rel (%p483) target = $region56
        $region55: #{tpu_custom_call.1} parent=51 // pred_region
          %s486 = smul.u32 2, %s18
          %p487 = scmp.lt.s32.totalorder %s486, 3
          %s488 = scalar_select %p487, %s486, 3
          %s489 = smul.addr %s488, 8
          %s490 = scalar_lea.vmem %s5, %s489
        $region56: #{tpu_custom_call.1} parent=51 // pred_fallthru
          _
      $region52: #{tpu_custom_call.1} parent=5 // pred_fallthru
        _
    $region6: #{tpu_custom_call.1} parent=1 // loop_footer
      %s16 = sadd.s32 1, %s12
    $region7: #{tpu_custom_call.1} parent=1 // loop_footer_branch
      %11 = sbr.rel target = $region3
    $region8: #{tpu_custom_call.1} parent=1 // loop_exit
      _
    %491 = vsyncpa [#allocation3], 1
    %s492 = scalar_lea.sflag [#allocation3], 1
    %493 = vsyncpa %s492, 1

</llo_original>
